<compile_context>
chip_gen: v5e
topology: v5e:2x2
jax: 0.10.0
libtpu: 0.0.40
codegen_flags: <defaults>
</compile_context>

<pallas_src>
import math

import numpy as np
import jax
import jax.numpy as jnp
from jax.experimental import pallas as pl
from jax.experimental.pallas import tpu as pltpu

# ----- ShallowConvNet hyper-parameters (from the PyTorch __init__) -----
CONV_FILTER = 13
STRIDES = 7
POOL_SIZE = 32
N_FILTERS_TIME = 40
N_FILTERS_SPATIAL = 40
BN_EPS = 1e-3
NUM_LABEL = 2

# ----- small problem sizes -----
BATCH = 2
NUM_CHANNEL = 4
NUM_LENGTH = 64
PAD = CONV_FILTER // 2                        # ZeroPad2d((6, 6, 0, 0))
L_PAD = NUM_LENGTH + 2 * PAD
L_OUT = L_PAD - CONV_FILTER + 1               # == NUM_LENGTH ('same' conv)
N_FEATURES = math.ceil((NUM_LENGTH - POOL_SIZE) / STRIDES)
assert (L_OUT - POOL_SIZE) // STRIDES + 1 == N_FEATURES, \
    "fc feature count must match the pooled width"

# Only used for one-time glue weight folding and the pure-JAX reference.
_HP = jax.lax.Precision.HIGHEST


def shallowconvnet_kernel(x_ref, waug_ref, pool_ref, wfc_ref, bfc_ref, out_ref):
    """Per-batch fused ShallowConvNet forward (one grid step = one batch element).

    x_ref    : (1, C_PAD, L_PAD) f32  zero-padded input; channel NUM_CHANNEL == 1.0
    waug_ref : (F_s, K*C_PAD)    bf16 merged conv_time∘conv_spatial∘BN weight;
                                      all biases live in the (k=0, bias-channel) col
    pool_ref : (L_OUT, W)        f32  shared 0 / (1/POOL_SIZE) averaging matrix
    wfc_ref  : (label, F_s, W)   f32  fc weight (torch flatten order g*W + w)
    bfc_ref  : (label, 1)        f32  fc bias
    out_ref  : (1, label, 1)     f32  logits for this batch element
    """
    xs = x_ref[0]                                     # (C_PAD, L_PAD)
    l_out = pool_ref.shape[0]

    # In-kernel im2col: 13 static tap slices, each an 8-row-aligned piece.
    cols = jnp.concatenate(
        [xs[:, k:k + l_out] for k in range(CONV_FILTER)], axis=0)   # (K*C_PAD, L_OUT)

    # conv_time ∘ conv_spatial ∘ BatchNorm (eval) + biases: one bf16 MXU matmul.
    y = jnp.dot(waug_ref[...], cols.astype(waug_ref.dtype),
                preferred_element_type=jnp.float32)                 # (F_s, L_OUT)
    y = y * y                                                       # square activation

    # AvgPool2d((1, POOL), stride (1, STRIDES)) as a matmul with a shared matrix.
    pooled = jnp.dot(y, pool_ref[...],
                     preferred_element_type=jnp.float32)            # (F_s, W)
    logp = jnp.log(jnp.maximum(pooled, 1e-6))

    # TODO(synk): Dropout(p=0.5) is the eval-mode identity here.

    # Fully connected: contract (F_s, W) against (label, F_s, W) by multiply +
    # lane reductions; flatten order already matches, so no restack/scratch.
    prod = wfc_ref[...] * logp[None, :, :]                          # (label, F_s, W)
    s1 = jnp.sum(prod, axis=-1)                                     # (label, F_s)
    logits = jnp.sum(s1, axis=-1, keepdims=True)                    # (label, 1)
    out_ref[...] = (logits + bfc_ref[...])[None, :, :]              # (1, label, 1)


def shallow_convnet_forward(x, params):
    """x: (N, 1, num_channel, num_length) float32 -> (N, num_label) logits."""
    wt, bt, ws, bs, gamma, beta, mean, var, wfc, bfc = params
    n, _, c, l = x.shape
    l_out = l                                         # 'same' padding along time
    l_padded = l + 2 * PAD
    n_feat = math.ceil((l - POOL_SIZE) / STRIDES)
    assert (l_out - POOL_SIZE) // STRIDES + 1 == n_feat
    # channel axis padded to a sublane multiple; slot `c` is a constant-one
    # "bias" channel carrying the merged conv/BN bias through the matmul.
    c_pad = ((c + 1 + 7) // 8) * 8

    # --- glue: zero-pad time, pad channels, add the constant-1 bias channel ---
    xp = jnp.pad(x[:, 0].astype(jnp.float32), ((0, 0), (0, 0), (PAD, PAD)))
    x_slab = jnp.zeros((n, c_pad, l_padded), jnp.float32)
    x_slab = x_slab.at[:, :c, :].set(xp)
    x_slab = x_slab.at[:, c, :].set(1.0)

    # --- glue: fold conv_time + conv_spatial + BN(eval) into one bf16 weight ---
    wm = jnp.einsum('gfc,fk->gkc', ws, wt, precision=_HP)            # (F_s, K, C)
    bm = jnp.einsum('gfc,f->g', ws, bt, precision=_HP) + bs          # (F_s,)
    scale = gamma / jnp.sqrt(var + BN_EPS)
    shift = beta - mean * scale
    wfold = scale[:, None, None] * wm                                # (F_s, K, C)
    bfold = scale * bm + shift                                       # (F_s,)
    waug = jnp.zeros((N_FILTERS_SPATIAL, CONV_FILTER, c_pad), jnp.float32)
    waug = waug.at[:, :, :c].set(wfold)
    waug = waug.at[:, 0, c].set(bfold)                # bias via the constant-1 channel
    waug = waug.reshape(N_FILTERS_SPATIAL,
                        CONV_FILTER * c_pad).astype(jnp.bfloat16)    # (F_s, K*C_PAD)

    # --- glue: batch-independent (L_out, W) pooling matrix ---
    pmat = np.zeros((l_out, n_feat), np.float32)
    for w in range(n_feat):
        pmat[w * STRIDES:w * STRIDES + POOL_SIZE, w] = 1.0 / POOL_SIZE
    pmat = jnp.asarray(pmat)

    # --- glue: fc weight as (label, F_s, W) (matches torch flatten g*W + w) ---
    wfc3 = wfc.reshape(NUM_LABEL, N_FILTERS_SPATIAL, n_feat)
    bfc2 = bfc.reshape(NUM_LABEL, 1)

    out3 = pl.pallas_call(
        shallowconvnet_kernel,
        out_shape=jax.ShapeDtypeStruct((n, NUM_LABEL, 1), jnp.float32),
        grid=(n,),
        in_specs=[
            pl.BlockSpec((1, c_pad, l_padded), lambda b: (b, 0, 0)),
            pl.BlockSpec(waug.shape, lambda b: (0, 0)),
            pl.BlockSpec(pmat.shape, lambda b: (0, 0)),
            pl.BlockSpec(wfc3.shape, lambda b: (0, 0, 0)),
            pl.BlockSpec(bfc2.shape, lambda b: (0, 0)),
        ],
        out_specs=pl.BlockSpec((1, NUM_LABEL, 1), lambda b: (b, 0, 0)),
        compiler_params=pltpu.CompilerParams(
            dimension_semantics=("parallel",)),
    )(x_slab, waug, pmat, wfc3, bfc2)
    return out3[:, :, 0]                                             # (N, num_label)


def reference_forward(x, params):
    """Pure-JAX reference mirroring the PyTorch forward (eval mode)."""
    wt, bt, ws, bs, gamma, beta, mean, var, wfc, bfc = params
    xp = jnp.pad(x[:, 0], ((0, 0), (0, 0), (PAD, PAD)))              # (N, C, L_PAD)
    cols = jnp.stack([xp[:, :, k:k + L_OUT] for k in range(CONV_FILTER)], axis=-1)
    t = jnp.einsum('nclk,fk->nfcl', cols, wt, precision=_HP) + bt[None, :, None, None]
    sp = jnp.einsum('nfcl,gfc->ngl', t, ws, precision=_HP) + bs[None, :, None]
    scale = gamma / jnp.sqrt(var + BN_EPS)
    shift = beta - mean * scale
    y = sp * scale[None, :, None] + shift[None, :, None]
    y = y * y
    pooled = jnp.stack(
        [jnp.mean(y[:, :, w * STRIDES:w * STRIDES + POOL_SIZE], axis=-1)
         for w in range(N_FEATURES)], axis=-1)                       # (N, F_s, W)
    logp = jnp.log(jnp.maximum(pooled, 1e-6))
    feat = logp.reshape(x.shape[0], -1)
    return jnp.dot(feat, wfc.T, precision=_HP) + bfc[None, :]


def init_params(key):
    """Deterministic parameter init (xavier_uniform weights, zero fc bias)."""
    ks = jax.random.split(key, 5)

    def xavier(k, shape, fan_in, fan_out):
        bound = math.sqrt(6.0 / (fan_in + fan_out))
        return jax.random.uniform(k, shape, jnp.float32, -bound, bound)

    # conv_time: weight (F_t, 1, 1, K); conv bias keeps default uniform init
    wt = xavier(ks[0], (N_FILTERS_TIME, CONV_FILTER),
                CONV_FILTER, N_FILTERS_TIME * CONV_FILTER)
    bt = jax.random.uniform(ks[1], (N_FILTERS_TIME,), jnp.float32,
                            -1.0 / math.sqrt(CONV_FILTER), 1.0 / math.sqrt(CONV_FILTER))
    # conv_spatial: weight (F_s, F_t, C, 1)
    fan_sp = N_FILTERS_TIME * NUM_CHANNEL
    ws = xavier(ks[2], (N_FILTERS_SPATIAL, N_FILTERS_TIME, NUM_CHANNEL), fan_sp, fan_sp)
    bs = jax.random.uniform(ks[3], (N_FILTERS_SPATIAL,), jnp.float32,
                            -1.0 / math.sqrt(fan_sp), 1.0 / math.sqrt(fan_sp))
    # batchnorm (fresh nn.BatchNorm2d, eval mode)
    gamma = jnp.ones((N_FILTERS_SPATIAL,), jnp.float32)
    beta = jnp.zeros((N_FILTERS_SPATIAL,), jnp.float32)
    mean = jnp.zeros((N_FILTERS_SPATIAL,), jnp.float32)
    var = jnp.ones((N_FILTERS_SPATIAL,), jnp.float32)
    # fc: weight (num_label, F_s * n_features), bias zeros (bias_init=zeros_)
    n_in = N_FILTERS_SPATIAL * N_FEATURES
    wfc = xavier(ks[4], (NUM_LABEL, n_in), n_in, NUM_LABEL)
    bfc = jnp.zeros((NUM_LABEL,), jnp.float32)
    return wt, bt, ws, bs, gamma, beta, mean, var, wfc, bfc


if __name__ == "__main__":
    key = jax.random.PRNGKey(0)
    k_x, k_p = jax.random.split(key)
    x = jax.random.normal(k_x, (BATCH, 1, NUM_CHANNEL, NUM_LENGTH), jnp.float32)
    params = init_params(k_p)

    out = jax.jit(shallow_convnet_forward)(x, params)
    out = jax.block_until_ready(out)

    ref = reference_forward(x, params)
    assert out.shape == (BATCH, NUM_LABEL), out.shape
    # The conv matmul runs with bf16 MXU inputs (f32 accumulate); the square ->
    # pool -> log -> fc chain stays f32, so 5e-2 is comfortably loose.
    if not bool(jnp.allclose(out, ref, atol=5e-2, rtol=5e-2)):
        raise AssertionError(f"Pallas kernel mismatch:\n{out}\nvs reference\n{ref}")
    print("KERNEL_OK")
</pallas_src>

<mosaic_0001>
module attributes {stable_mosaic.version = 11 : i64} {
  func.func @shallowconvnet_kernel(%arg0: i32, %arg1: memref<1x8x76xf32, #tpu.memory_space<vmem>>, %arg2: memref<40x104xbf16, #tpu.memory_space<vmem>>, %arg3: memref<64x5xf32, #tpu.memory_space<vmem>>, %arg4: memref<2x40x5xf32, #tpu.memory_space<vmem>>, %arg5: memref<2x1xf32, #tpu.memory_space<vmem>>, %arg6: memref<1x2x1xf32, #tpu.memory_space<vmem>>) attributes {dimension_semantics = [#tpu.dimension_semantics<parallel>], iteration_bounds = array<i64: 2>, scalar_prefetch = 0 : i64, scratch_operands = 0 : i64, tpu.core_type = #tpu.core_type<tc>, window_params = [{transform_indices = @transform_0, window_bounds = array<i64: 1, 8, 76>}, {pipeline_mode = #tpu.pipeline_mode<synchronous>, transform_indices = @transform_1, window_bounds = array<i64: 40, 104>}, {pipeline_mode = #tpu.pipeline_mode<synchronous>, transform_indices = @transform_2, window_bounds = array<i64: 64, 5>}, {pipeline_mode = #tpu.pipeline_mode<synchronous>, transform_indices = @transform_3, window_bounds = array<i64: 2, 40, 5>}, {pipeline_mode = #tpu.pipeline_mode<synchronous>, transform_indices = @transform_4, window_bounds = array<i64: 2, 1>}, {transform_indices = @transform_5, window_bounds = array<i64: 1, 2, 1>}]} {
    %c0 = arith.constant 0 : index
    %c0_0 = arith.constant 0 : index
    %c0_1 = arith.constant 0 : index
    %0 = vector.load %arg1[%c0, %c0_0, %c0_1] : memref<1x8x76xf32, #tpu.memory_space<vmem>>, vector<1x8x76xf32>
    %1 = vector.shape_cast %0 : vector<1x8x76xf32> to vector<8x76xf32>
    %2 = vector.extract_strided_slice %1 {offsets = [0, 0], sizes = [8, 64], strides = [1, 1]} : vector<8x76xf32> to vector<8x64xf32>
    %3 = vector.extract_strided_slice %1 {offsets = [0, 1], sizes = [8, 64], strides = [1, 1]} : vector<8x76xf32> to vector<8x64xf32>
    %4 = vector.extract_strided_slice %1 {offsets = [0, 2], sizes = [8, 64], strides = [1, 1]} : vector<8x76xf32> to vector<8x64xf32>
    %5 = vector.extract_strided_slice %1 {offsets = [0, 3], sizes = [8, 64], strides = [1, 1]} : vector<8x76xf32> to vector<8x64xf32>
    %6 = vector.extract_strided_slice %1 {offsets = [0, 4], sizes = [8, 64], strides = [1, 1]} : vector<8x76xf32> to vector<8x64xf32>
    %7 = vector.extract_strided_slice %1 {offsets = [0, 5], sizes = [8, 64], strides = [1, 1]} : vector<8x76xf32> to vector<8x64xf32>
    %8 = vector.extract_strided_slice %1 {offsets = [0, 6], sizes = [8, 64], strides = [1, 1]} : vector<8x76xf32> to vector<8x64xf32>
    %9 = vector.extract_strided_slice %1 {offsets = [0, 7], sizes = [8, 64], strides = [1, 1]} : vector<8x76xf32> to vector<8x64xf32>
    %10 = vector.extract_strided_slice %1 {offsets = [0, 8], sizes = [8, 64], strides = [1, 1]} : vector<8x76xf32> to vector<8x64xf32>
    %11 = vector.extract_strided_slice %1 {offsets = [0, 9], sizes = [8, 64], strides = [1, 1]} : vector<8x76xf32> to vector<8x64xf32>
    %12 = vector.extract_strided_slice %1 {offsets = [0, 10], sizes = [8, 64], strides = [1, 1]} : vector<8x76xf32> to vector<8x64xf32>
    %13 = vector.extract_strided_slice %1 {offsets = [0, 11], sizes = [8, 64], strides = [1, 1]} : vector<8x76xf32> to vector<8x64xf32>
    %14 = vector.extract_strided_slice %1 {offsets = [0, 12], sizes = [8, 64], strides = [1, 1]} : vector<8x76xf32> to vector<8x64xf32>
    %15 = tpu.concatenate %2, %3, %4, %5, %6, %7, %8, %9, %10, %11, %12, %13, %14 in 0 : vector<8x64xf32>, vector<8x64xf32>, vector<8x64xf32>, vector<8x64xf32>, vector<8x64xf32>, vector<8x64xf32>, vector<8x64xf32>, vector<8x64xf32>, vector<8x64xf32>, vector<8x64xf32>, vector<8x64xf32>, vector<8x64xf32>, vector<8x64xf32> -> vector<104x64xf32>
    %c0_2 = arith.constant 0 : index
    %c0_3 = arith.constant 0 : index
    %16 = vector.load %arg2[%c0_2, %c0_3] : memref<40x104xbf16, #tpu.memory_space<vmem>>, vector<40x104xbf16>
    %17 = arith.truncf %15 : vector<104x64xf32> to vector<104x64xbf16>
    %cst = arith.constant dense<0.000000e+00> : vector<40x64xf32>
    %18 = tpu.matmul %16, %17, %cst {dimension_numbers = #tpu.dot_dimension_numbers<[1], [0], [0], [1], [0, 0, 1, 1], [], []>} : vector<40x104xbf16>, vector<104x64xbf16>, vector<40x64xf32> -> vector<40x64xf32>
    %19 = arith.mulf %18, %18 : vector<40x64xf32>
    %c0_4 = arith.constant 0 : index
    %c0_5 = arith.constant 0 : index
    %20 = vector.load %arg3[%c0_4, %c0_5] : memref<64x5xf32, #tpu.memory_space<vmem>>, vector<64x5xf32>
    %cst_6 = arith.constant dense<0.000000e+00> : vector<40x5xf32>
    %21 = tpu.matmul %19, %20, %cst_6 {dimension_numbers = #tpu.dot_dimension_numbers<[1], [0], [0], [1], [0, 0, 1, 1], [], []>} : vector<40x64xf32>, vector<64x5xf32>, vector<40x5xf32> -> vector<40x5xf32>
    %cst_7 = arith.constant 9.99999997E-7 : f32
    %22 = vector.broadcast %cst_7 : f32 to vector<40x5xf32>
    %23 = arith.maximumf %21, %22 : vector<40x5xf32>
    %24 = math.log %23 : vector<40x5xf32>
    %c0_8 = arith.constant 0 : index
    %c0_9 = arith.constant 0 : index
    %c0_10 = arith.constant 0 : index
    %25 = vector.load %arg4[%c0_8, %c0_9, %c0_10] : memref<2x40x5xf32, #tpu.memory_space<vmem>>, vector<2x40x5xf32>
    %26 = vector.shape_cast %24 : vector<40x5xf32> to vector<1x40x5xf32>
    %27 = vector.broadcast %26 : vector<1x40x5xf32> to vector<2x40x5xf32>
    %28 = arith.mulf %25, %27 : vector<2x40x5xf32>
    %cst_11 = arith.constant dense<0.000000e+00> : vector<2x40xf32>
    %29 = vector.multi_reduction <add>, %28, %cst_11 [2] : vector<2x40x5xf32> to vector<2x40xf32>
    %cst_12 = arith.constant dense<0.000000e+00> : vector<2xf32>
    %30 = vector.multi_reduction <add>, %29, %cst_12 [1] : vector<2x40xf32> to vector<2xf32>
    %31 = vector.shape_cast %30 : vector<2xf32> to vector<2x1xf32>
    %c0_13 = arith.constant 0 : index
    %c0_14 = arith.constant 0 : index
    %32 = vector.load %arg5[%c0_13, %c0_14] : memref<2x1xf32, #tpu.memory_space<vmem>>, vector<2x1xf32>
    %33 = arith.addf %31, %32 : vector<2x1xf32>
    %34 = vector.shape_cast %33 : vector<2x1xf32> to vector<1x2x1xf32>
    %c0_15 = arith.constant 0 : index
    %c0_16 = arith.constant 0 : index
    %c0_17 = arith.constant 0 : index
    %35 = vector.load %arg6[%c0_15, %c0_16, %c0_17] : memref<1x2x1xf32, #tpu.memory_space<vmem>>, vector<1x2x1xf32>
    tpu.vector_store %arg6[%c0_15, %c0_16, %c0_17], %34 {strides = array<i32>} : memref<1x2x1xf32, #tpu.memory_space<vmem>>, vector<1x2x1xf32>,
    return
  }
  func.func @transform_0(%arg0: i32) -> (i32, i32, i32) {
    %c0_i32 = arith.constant 0 : i32
    %c0_i32_0 = arith.constant 0 : i32
    %c0_i32_1 = arith.constant 0 : i32
    return %arg0, %c0_i32, %c0_i32_0 : i32, i32, i32
  }
  func.func @transform_1(%arg0: i32) -> (i32, i32) {
    %c0_i32 = arith.constant 0 : i32
    %c0_i32_0 = arith.constant 0 : i32
    %c0_i32_1 = arith.constant 0 : i32
    return %c0_i32, %c0_i32_0 : i32, i32
  }
  func.func @transform_2(%arg0: i32) -> (i32, i32) {
    %c0_i32 = arith.constant 0 : i32
    %c0_i32_0 = arith.constant 0 : i32
    %c0_i32_1 = arith.constant 0 : i32
    return %c0_i32, %c0_i32_0 : i32, i32
  }
  func.func @transform_3(%arg0: i32) -> (i32, i32, i32) {
    %c0_i32 = arith.constant 0 : i32
    %c0_i32_0 = arith.constant 0 : i32
    %c0_i32_1 = arith.constant 0 : i32
    %c0_i32_2 = arith.constant 0 : i32
    return %c0_i32, %c0_i32_0, %c0_i32_1 : i32, i32, i32
  }
  func.func @transform_4(%arg0: i32) -> (i32, i32) {
    %c0_i32 = arith.constant 0 : i32
    %c0_i32_0 = arith.constant 0 : i32
    %c0_i32_1 = arith.constant 0 : i32
    return %c0_i32, %c0_i32_0 : i32, i32
  }
  func.func @transform_5(%arg0: i32) -> (i32, i32, i32) {
    %c0_i32 = arith.constant 0 : i32
    %c0_i32_0 = arith.constant 0 : i32
    %c0_i32_1 = arith.constant 0 : i32
    return %arg0, %c0_i32, %c0_i32_0 : i32, i32, i32
  }
}

</mosaic_0001>

<llo_original>
// kernel: shallow_convnet_forward.1
$region0: #{shallow_convnet_forward.1}
  #allocation0 [shape = 'u32[]', space=smem, size = 0x4, offset = 0x4, fixed_abs, tag = 'smem constant byte address 0x4 - core index']
  #allocation1 [shape = 'u32[72,128]{1,0:T(1,128)}', space=vmem, size = 0x9000, scoped, tag = 'internal scratch']
  %s0 = inlined_call_operand.vmem [shape: f32[2,8,76], index: 0, kind: input, shape index: {}]
  %s1 = inlined_call_operand.vmem [shape: bf16[40,104], index: 1, kind: input, shape index: {}]
  %s2 = inlined_call_operand.vmem [shape: f32[64,5], index: 2, kind: input, shape index: {}]
  %s3 = inlined_call_operand.vmem [shape: f32[2,40,5], index: 3, kind: input, shape index: {}]
  %s4 = inlined_call_operand.vmem [shape: f32[2,1], index: 4, kind: input, shape index: {}]
  %s5 = inlined_call_operand.vmem [shape: f32[2,2,1], index: 5, kind: output, shape index: {}]
  %s6 = sld [smem:[#allocation0]]
  $region53: #{shallow_convnet_forward.1} parent=0
    _
  %s8 = ssub.s32 1, %s6
  %s9 = scalar_select 0, %s8, %s6
  loop: start=0, step=1, limit=4
  $region2: #{shallow_convnet_forward.1} parent=0 // loop_pre_header
    _
  $region3: #{shallow_convnet_forward.1} parent=0 // loop_header
    %s11 = sphi 0, %s15
    %p12 = scmp.ge.s32.totalorder %s11, 4
    %s21 = sphi 0, %s23
    %s24 = sphi 0, %s21
    %s25 = sphi 0, %s24
    %s41 = sphi 0, %s25
    %s45 = sphi 0, %s45
    %s47 = sphi 0, %s45
    %s48 = sphi 0, %s47
    %s62 = sphi 0, %s48
    %s66 = sphi 0, %s66
    %s68 = sphi 0, %s66
    %s69 = sphi 0, %s68
    %s83 = sphi 0, %s69
    %s87 = sphi 0, %s87
    %s89 = sphi 0, %s87
    %s90 = sphi 0, %s89
    %s104 = sphi 0, %s90
    %s108 = sphi 0, %s108
    %s110 = sphi 0, %s108
    %s111 = sphi 0, %s110
    %s125 = sphi 0, %s111
    %s131 = sphi 0, %s133
    %s134 = sphi 0, %s131
    %s135 = sphi 0, %s134
    %s151 = sphi 0, %s135
  $region4: #{shallow_convnet_forward.1} parent=0 // loop_header_branch
    %14 = sbr.rel (%p12) target = $region8
  $region5: #{shallow_convnet_forward.1} parent=0 // loop_body
    %s16 = ssub.s32 %s11, 1
    %s17 = ssub.s32 %s11, 2
    %s18 = sadd.s32 %s11, 1
    %s19 = ssub.s32 %s11, %s18
    %p20 = scmp.eq.s32.totalorder %s19, 0
    %s22 = sadd.s32 %s21, 1
    %s23 = scalar_select %p20, %s21, %s22
    %p26 = pneg %p20
    %p27 = scmp.eq.s32.totalorder %s11, 1
    %p28 = por %p26, %p27
    %p29 = scmp.ne.s32.totalorder %s21, %s24
    %p30 = scmp.eq.s32.totalorder %s11, 0
    %p31 = por %p29, %p30
    %p32 = scmp.ne.s32.totalorder %s21, %s24
    %p33 = scmp.eq.s32.totalorder %s16, 1
    %p34 = por %p32, %p33
    %p35 = scmp.ne.s32.totalorder %s24, %s25
    %p36 = scmp.eq.s32.totalorder %s16, 0
    %p37 = por %p35, %p36
    %p38 = scmp.ne.s32.totalorder %s24, %s25
    %p39 = scmp.eq.s32.totalorder %s17, 1
    %p40 = por %p38, %p39
    %p42 = scmp.ne.s32.totalorder %s25, %s41
    %p43 = scmp.eq.s32.totalorder %s17, 0
    %p44 = por %p42, %p43
    %s46 = sadd.s32 %s45, 1
    %p49 = scmp.eq.s32.totalorder %s11, 1
    %p50 = scmp.ne.s32.totalorder %s45, %s47
    %p51 = scmp.eq.s32.totalorder %s11, 0
    %p52 = por %p50, %p51
    %p53 = scmp.ne.s32.totalorder %s45, %s47
    %p54 = scmp.eq.s32.totalorder %s16, 1
    %p55 = por %p53, %p54
    %p56 = scmp.ne.s32.totalorder %s47, %s48
    %p57 = scmp.eq.s32.totalorder %s16, 0
    %p58 = por %p56, %p57
    %p59 = scmp.ne.s32.totalorder %s47, %s48
    %p60 = scmp.eq.s32.totalorder %s17, 1
    %p61 = por %p59, %p60
    %p63 = scmp.ne.s32.totalorder %s48, %s62
    %p64 = scmp.eq.s32.totalorder %s17, 0
    %p65 = por %p63, %p64
    %s67 = sadd.s32 %s66, 1
    %p70 = scmp.eq.s32.totalorder %s11, 1
    %p71 = scmp.ne.s32.totalorder %s66, %s68
    %p72 = scmp.eq.s32.totalorder %s11, 0
    %p73 = por %p71, %p72
    %p74 = scmp.ne.s32.totalorder %s66, %s68
    %p75 = scmp.eq.s32.totalorder %s16, 1
    %p76 = por %p74, %p75
    %p77 = scmp.ne.s32.totalorder %s68, %s69
    %p78 = scmp.eq.s32.totalorder %s16, 0
    %p79 = por %p77, %p78
    %p80 = scmp.ne.s32.totalorder %s68, %s69
    %p81 = scmp.eq.s32.totalorder %s17, 1
    %p82 = por %p80, %p81
    %p84 = scmp.ne.s32.totalorder %s69, %s83
    %p85 = scmp.eq.s32.totalorder %s17, 0
    %p86 = por %p84, %p85
    %s88 = sadd.s32 %s87, 1
    %p91 = scmp.eq.s32.totalorder %s11, 1
    %p92 = scmp.ne.s32.totalorder %s87, %s89
    %p93 = scmp.eq.s32.totalorder %s11, 0
    %p94 = por %p92, %p93
    %p95 = scmp.ne.s32.totalorder %s87, %s89
    %p96 = scmp.eq.s32.totalorder %s16, 1
    %p97 = por %p95, %p96
    %p98 = scmp.ne.s32.totalorder %s89, %s90
    %p99 = scmp.eq.s32.totalorder %s16, 0
    %p100 = por %p98, %p99
    %p101 = scmp.ne.s32.totalorder %s89, %s90
    %p102 = scmp.eq.s32.totalorder %s17, 1
    %p103 = por %p101, %p102
    %p105 = scmp.ne.s32.totalorder %s90, %s104
    %p106 = scmp.eq.s32.totalorder %s17, 0
    %p107 = por %p105, %p106
    %s109 = sadd.s32 %s108, 1
    %p112 = scmp.eq.s32.totalorder %s11, 1
    %p113 = scmp.ne.s32.totalorder %s108, %s110
    %p114 = scmp.eq.s32.totalorder %s11, 0
    %p115 = por %p113, %p114
    %p116 = scmp.ne.s32.totalorder %s108, %s110
    %p117 = scmp.eq.s32.totalorder %s16, 1
    %p118 = por %p116, %p117
    %p119 = scmp.ne.s32.totalorder %s110, %s111
    %p120 = scmp.eq.s32.totalorder %s16, 0
    %p121 = por %p119, %p120
    %p122 = scmp.ne.s32.totalorder %s110, %s111
    %p123 = scmp.eq.s32.totalorder %s17, 1
    %p124 = por %p122, %p123
    %p126 = scmp.ne.s32.totalorder %s111, %s125
    %p127 = scmp.eq.s32.totalorder %s17, 0
    %p128 = por %p126, %p127
    %s129 = ssub.s32 %s11, %s18
    %p130 = scmp.eq.s32.totalorder %s129, 0
    %s132 = sadd.s32 %s131, 1
    %s133 = scalar_select %p130, %s131, %s132
    %p136 = pneg %p130
    %p137 = scmp.eq.s32.totalorder %s11, 1
    %p138 = por %p136, %p137
    %p139 = scmp.ne.s32.totalorder %s131, %s134
    %p140 = scmp.eq.s32.totalorder %s11, 0
    %p141 = por %p139, %p140
    %p142 = scmp.ne.s32.totalorder %s131, %s134
    %p143 = scmp.eq.s32.totalorder %s16, 1
    %p144 = por %p142, %p143
    %p145 = scmp.ne.s32.totalorder %s134, %s135
    %p146 = scmp.eq.s32.totalorder %s16, 0
    %p147 = por %p145, %p146
    %p148 = scmp.ne.s32.totalorder %s134, %s135
    %p149 = scmp.eq.s32.totalorder %s17, 1
    %p150 = por %p148, %p149
    %p152 = scmp.ne.s32.totalorder %s135, %s151
    %p153 = scmp.eq.s32.totalorder %s17, 0
    %p154 = por %p152, %p153
    %p155 = scmp.le.s32.totalorder 1, %s11
    %p156 = scmp.lt.s32.totalorder %s11, 3
    %p157 = pnand %p155, %p156
    %p158 = pneg %p157
    // Predicated region
    $region9: #{shallow_convnet_forward.1} parent=5 // pred_check
      _
    $region10: #{shallow_convnet_forward.1} parent=5 // pred_check_branch
      %160 = sbr.rel (%p157) target = $region12
    $region11: #{shallow_convnet_forward.1} parent=5 // pred_region
      %s161 = ssub.s32 %s11, 1
      // Predicated region
      $region13: #{shallow_convnet_forward.1} parent=11 // pred_check
        %p162 = pneg %p58
      $region14: #{shallow_convnet_forward.1} parent=11 // pred_check_branch
        %164 = sbr.rel (%p162) target = $region16
      $region15: #{shallow_convnet_forward.1} parent=11 // pred_region
        _
      $region16: #{shallow_convnet_forward.1} parent=11 // pred_fallthru
        _
      // Predicated region
      $region17: #{shallow_convnet_forward.1} parent=11 // pred_check
        %p165 = pneg %p79
      $region18: #{shallow_convnet_forward.1} parent=11 // pred_check_branch
        %167 = sbr.rel (%p165) target = $region20
      $region19: #{shallow_convnet_forward.1} parent=11 // pred_region
        _
      $region20: #{shallow_convnet_forward.1} parent=11 // pred_fallthru
        _
      // Predicated region
      $region21: #{shallow_convnet_forward.1} parent=11 // pred_check
        %p168 = pneg %p100
      $region22: #{shallow_convnet_forward.1} parent=11 // pred_check_branch
        %170 = sbr.rel (%p168) target = $region24
      $region23: #{shallow_convnet_forward.1} parent=11 // pred_region
        _
      $region24: #{shallow_convnet_forward.1} parent=11 // pred_fallthru
        _
      // Predicated region
      $region25: #{shallow_convnet_forward.1} parent=11 // pred_check
        %p171 = pneg %p121
      $region26: #{shallow_convnet_forward.1} parent=11 // pred_check_branch
        %173 = sbr.rel (%p171) target = $region28
      $region27: #{shallow_convnet_forward.1} parent=11 // pred_region
        _
      $region28: #{shallow_convnet_forward.1} parent=11 // pred_fallthru
        _
    $region12: #{shallow_convnet_forward.1} parent=5 // pred_fallthru
      _
    %p174 = scmp.lt.s32.totalorder %s11, 2
    // Predicated region
    $region29: #{shallow_convnet_forward.1} parent=5 // pred_check
      %p175 = pneg %p174
    $region30: #{shallow_convnet_forward.1} parent=5 // pred_check_branch
      %177 = sbr.rel (%p175) target = $region32
    $region31: #{shallow_convnet_forward.1} parent=5 // pred_region
      // Predicated region
      $region33: #{shallow_convnet_forward.1} parent=31 // pred_check
        %p178 = pneg %p31
      $region34: #{shallow_convnet_forward.1} parent=31 // pred_check_branch
        %180 = sbr.rel (%p178) target = $region36
      $region35: #{shallow_convnet_forward.1} parent=31 // pred_region
        %p181 = scmp.lt.s32.totalorder %s11, 1
        %s182 = scalar_select %p181, %s11, 1
        %s183 = smul.addr %s182, 8
        %s184 = scalar_lea.vmem %s0, %s183
      $region36: #{shallow_convnet_forward.1} parent=31 // pred_fallthru
        _
    $region32: #{shallow_convnet_forward.1} parent=5 // pred_fallthru
      _
    %p185 = scmp.le.s32.totalorder 1, %s11
    %p186 = scmp.lt.s32.totalorder %s11, 3
    %p187 = pnand %p185, %p186
    %p188 = pneg %p187
    // Predicated region
    $region37: #{shallow_convnet_forward.1} parent=5 // pred_check
      _
    $region38: #{shallow_convnet_forward.1} parent=5 // pred_check_branch
      %190 = sbr.rel (%p187) target = $region40
    $region39: #{shallow_convnet_forward.1} parent=5 // pred_region
      %s191 = ssub.s32 %s11, 1
      %p192 = scmp.lt.s32.totalorder %s16, 1
      %s193 = scalar_select %p192, %s16, 1
      %s194 = smul.addr %s193, 8
      %s195 = scalar_lea.vmem %s0, %s194
      %p196 = pneg %p37
      %p197 = pneg %p34
      %p198 = pneg %p58
      %p199 = pneg %p55
      %p200 = pneg %p79
      %p201 = pneg %p76
      %p202 = pneg %p100
      %p203 = pneg %p97
      %p204 = pneg %p121
      %p205 = pneg %p118
      %p206 = pneg %p147
      %p207 = pneg %p144
      %p208 = scmp.lt.s32.totalorder %s16, 1
      %s209 = scalar_select %p208, %s16, 1
      %s210 = smul.addr %s209, 2
      %s211 = scalar_lea.vmem %s5, %s210
      %p212 = scmp.lt.s32.totalorder %s16, 1
      %s213 = scalar_select %p212, %s16, 1
      %s214 = smul.addr %s213, 8
      %s215 = scalar_lea.vmem %s0, %s214
      %p216 = scmp.lt.s32.totalorder %s16, 1
      %s217 = scalar_select %p216, %s16, 1
      %s218 = smul.addr %s217, 2
      %s219 = scalar_lea.vmem %s5, %s218
      %v221 = vld [vmem:[%s215] sm:$0xff]
      %223 = vrot.lane.b32.xlu0 %v221, 127
      %v224 = vpop.permute.xlu0 %223
      %226 = vrot.lane.b32.xlu0 %v221, 126
      %v227 = vpop.permute.xlu0 %226
      %229 = vrot.lane.b32.xlu0 %v221, 125
      %v230 = vpop.permute.xlu0 %229
      %232 = vrot.lane.b32.xlu0 %v221, 124
      %v233 = vpop.permute.xlu0 %232
      %235 = vrot.lane.b32.xlu0 %v221, 123
      %v236 = vpop.permute.xlu0 %235
      %238 = vrot.lane.b32.xlu0 %v221, 122
      %v239 = vpop.permute.xlu0 %238
      %241 = vrot.lane.b32.xlu0 %v221, 121
      %v242 = vpop.permute.xlu0 %241
      %244 = vrot.lane.b32.xlu0 %v221, 120
      %v245 = vpop.permute.xlu0 %244
      %247 = vrot.lane.b32.xlu0 %v221, 119
      %v248 = vpop.permute.xlu0 %247
      %250 = vrot.lane.b32.xlu0 %v221, 118
      %v251 = vpop.permute.xlu0 %250
      %253 = vrot.lane.b32.xlu0 %v221, 117
      %v254 = vpop.permute.xlu0 %253
      %256 = vrot.lane.b32.xlu0 %v221, 116
      %v257 = vpop.permute.xlu0 %256
      %v259 = vld [vmem:[%s1] sm:$0xf]
      %v260 = vld [vmem:[%s1 + $0x4] sm:$0xf]
      %v261 = vld [vmem:[%s1 + $0x8] sm:$0xf]
      %v262 = vld [vmem:[%s1 + $0xc] sm:$0xf]
      %v263 = vld [vmem:[%s1 + $0x10] sm:$0xf]
      %v264 = vpack.c.bf16 %v224, %v221
      %v265 = vpack.c.bf16 %v230, %v227
      %v266 = vpack.c.bf16 %v236, %v233
      %v267 = vpack.c.bf16 %v242, %v239
      %v268 = vpack.c.bf16 %v248, %v245
      %v269 = vpack.c.bf16 %v254, %v251
      %v270 = vpack.c.bf16 %v257, %v257
      %v276 = vunpack.c.l.b16 %v259
      %v277 = vunpack.c.l.b16 %v260
      %v278 = vunpack.c.l.b16 %v261
      %v279 = vunpack.c.l.b16 %v262
      %v280 = vunpack.c.l.b16 %v263
      %v281 = vpack.c.b16 %v277, %v276
      %v282 = vpack.c.b16 %v279, %v278
      %v283 = vpack.c.b16 %v280, %v280
      %vm284 = vcmask 850944
      %v286 = vsel %vm284, %v281, 0
      %v289 = vsel %vm284, %v282, 0
      %v292 = vsel %vm284, %v283, 0
      %vm294 = vcmask 1043456
      %v296 = vsel %vm294, %v270, 0
      %298 = vmatpush.bf16.msra.mxu0 0
      %299 = vmatpush.bf16.msra.mxu0 %v296
      %300 = vmatpush.bf16.msra.mxu0 %v269
      %301 = vmatpush.bf16.msra.mxu0 %v268
      %302 = vmatpush.bf16.msra.mxu0 %v267
      %303 = vmatpush.bf16.msra.mxu0 %v266
      %304 = vmatpush.bf16.msra.mxu0 %v265
      %305 = vmatpush.bf16.msra.mxu0 %v264
      %306 = vmatmul.bf16.gmra.mxu0 %v286
      %v307 = vpop.f32.mrf.mxu0
      %v308 = vadd.f32 0.0, %v307
      %v309 = vpop.f32.mrf.mxu0
      %v310 = vadd.f32 0.0, %v309
      %311 = vmatmul.bf16.gmra.mxu0 %v289
      %v312 = vpop.f32.mrf.mxu0
      %v313 = vadd.f32 0.0, %v312
      %v314 = vpop.f32.mrf.mxu0
      %v315 = vadd.f32 0.0, %v314
      %316 = vmatmul.bf16.gmra.mxu0 %v292
      %v317 = vpop.f32.mrf.mxu0
      %v318 = vadd.f32 0.0, %v317
      %v319 = vpop.f32.mrf.mxu0
      %320 = vdwg.mxu0
      %v321 = vmul.f32 %v308, %v308
      %v322 = vmul.f32 %v310, %v310
      %v323 = vmul.f32 %v313, %v313
      %v324 = vmul.f32 %v315, %v315
      %v325 = vmul.f32 %v318, %v318
      %v326 = vld [vmem:[%s2] sm:$0xff]
      %v327 = vld [vmem:[%s2 + $0x8] sm:$0xff]
      %v328 = vld [vmem:[%s2 + $0x10] sm:$0xff]
      %v329 = vld [vmem:[%s2 + $0x18] sm:$0xff]
      %v330 = vld [vmem:[%s2 + $0x20] sm:$0xff]
      %v331 = vld [vmem:[%s2 + $0x28] sm:$0xff]
      %v332 = vld [vmem:[%s2 + $0x30] sm:$0xff]
      %v333 = vld [vmem:[%s2 + $0x38] sm:$0xff]
      %vm334 = vcmask 523264
      %v336 = vsel %vm334, %v321, 0
      %v339 = vsel %vm334, %v322, 0
      %v342 = vsel %vm334, %v323, 0
      %v345 = vsel %vm334, %v324, 0
      %v348 = vsel %vm334, %v325, 0
      %350 = vmatpush.msra.mxu0 0.0
      %351 = vmatpush.msra.mxu0 0.0
      %352 = vmatpush.msra.mxu0 0.0
      %353 = vmatpush.msra.mxu0 0.0
      %354 = vmatpush.msra.mxu0 0.0
      %355 = vmatpush.msra.mxu0 0.0
      %356 = vmatpush.msra.mxu0 0.0
      %357 = vmatpush.msra.mxu0 0.0
      %358 = vmatpush.msra.mxu0 %v333
      %359 = vmatpush.msra.mxu0 %v332
      %360 = vmatpush.msra.mxu0 %v331
      %361 = vmatpush.msra.mxu0 %v330
      %362 = vmatpush.msra.mxu0 %v329
      %363 = vmatpush.msra.mxu0 %v328
      %364 = vmatpush.msra.mxu0 %v327
      %365 = vmatpush.msra.mxu0 %v326
      %366 = vmatmul.f32.gmra.mxu0 %v336
      %v367 = vpop.f32.mrf.mxu0
      %v368 = vadd.f32 0.0, %v367
      %369 = vmatmul.f32.gmra.mxu0 %v339
      %v370 = vpop.f32.mrf.mxu0
      %v371 = vadd.f32 0.0, %v370
      %372 = vmatmul.f32.gmra.mxu0 %v342
      %v373 = vpop.f32.mrf.mxu0
      %v374 = vadd.f32 0.0, %v373
      %375 = vmatmul.f32.gmra.mxu0 %v345
      %v376 = vpop.f32.mrf.mxu0
      %v377 = vadd.f32 0.0, %v376
      %378 = vmatmul.f32.gmra.mxu0 %v348
      %v379 = vpop.f32.mrf.mxu0
      %v380 = vadd.f32 0.0, %v379
      %381 = vdwg.mxu0
      %v382 = vmax.f32 %v368, 1e-06
      %v383 = vmax.f32 %v371, 1e-06
      %v384 = vmax.f32 %v374, 1e-06
      %v385 = vmax.f32 %v377, 1e-06
      %v386 = vmax.f32 %v380, 1e-06
      %v387 = vlog2.pop %v382
      %v388 = vmul.f32 %v387, 0.6931472
      %v389 = vlog2.pop %v383
      %v390 = vmul.f32 %v389, 0.6931472
      %v391 = vlog2.pop %v384
      %v392 = vmul.f32 %v391, 0.6931472
      %v393 = vlog2.pop %v385
      %v394 = vmul.f32 %v393, 0.6931472
      %v395 = vlog2.pop %v386
      %v396 = vmul.f32 %v395, 0.6931472
      %v397 = vld [vmem:[%s3] sm:$0xff]
      %v398 = vld [vmem:[%s3 + $0x8] sm:$0xff]
      %v399 = vld [vmem:[%s3 + $0x10] sm:$0xff]
      %v400 = vld [vmem:[%s3 + $0x18] sm:$0xff]
      %v401 = vld [vmem:[%s3 + $0x20] sm:$0xff]
      %v402 = vld [vmem:[%s3 + $0x28] sm:$0xff]
      %v403 = vld [vmem:[%s3 + $0x30] sm:$0xff]
      %v404 = vld [vmem:[%s3 + $0x38] sm:$0xff]
      %v405 = vld [vmem:[%s3 + $0x40] sm:$0xff]
      %v406 = vld [vmem:[%s3 + $0x48] sm:$0xff]
      %v407 = vmul.f32 %v397, %v388
      %v408 = vmul.f32 %v398, %v390
      %v409 = vmul.f32 %v399, %v392
      %v410 = vmul.f32 %v400, %v394
      %v411 = vmul.f32 %v401, %v396
      %v412 = vmul.f32 %v402, %v388
      %v413 = vmul.f32 %v403, %v390
      %v414 = vmul.f32 %v404, %v392
      %v415 = vmul.f32 %v405, %v394
      %v416 = vmul.f32 %v406, %v396
      %vm417 = vcmask 39936
      %v418 = vsel %vm417, %v407, 0.0
      %419 = vadd.xlane.f32.xlu0 %v418
      %v420 = vpop.xlane.xlu0 %419
      %v421 = vsel %vm417, %v408, 0.0
      %422 = vadd.xlane.f32.xlu0 %v421
      %v423 = vpop.xlane.xlu0 %422
      %v424 = vsel %vm417, %v409, 0.0
      %425 = vadd.xlane.f32.xlu0 %v424
      %v426 = vpop.xlane.xlu0 %425
      %v427 = vsel %vm417, %v410, 0.0
      %428 = vadd.xlane.f32.xlu0 %v427
      %v429 = vpop.xlane.xlu0 %428
      %v430 = vsel %vm417, %v411, 0.0
      %431 = vadd.xlane.f32.xlu0 %v430
      %v432 = vpop.xlane.xlu0 %431
      %v433 = vsel %vm417, %v412, 0.0
      %434 = vadd.xlane.f32.xlu0 %v433
      %v435 = vpop.xlane.xlu0 %434
      %v436 = vsel %vm417, %v413, 0.0
      %437 = vadd.xlane.f32.xlu0 %v436
      %v438 = vpop.xlane.xlu0 %437
      %v439 = vsel %vm417, %v414, 0.0
      %440 = vadd.xlane.f32.xlu0 %v439
      %v441 = vpop.xlane.xlu0 %440
      %v442 = vsel %vm417, %v415, 0.0
      %443 = vadd.xlane.f32.xlu0 %v442
      %v444 = vpop.xlane.xlu0 %443
      %v445 = vsel %vm417, %v416, 0.0
      %446 = vadd.xlane.f32.xlu0 %v445
      %v447 = vpop.xlane.xlu0 %446
      %v458 = vlaneseq
      %v459 = vand.u32 %v458, 127
      %v460 = vperm.slane %v420, %v459
      %v461 = vadd.s32 %v459, 4294967288
      %v462 = vperm.slane %v423, %v461
      %vm463 = vcmask 130112
      %v464 = vsel %vm463, %v462, %v460
      %v465 = vadd.s32 %v459, 4294967280
      %v466 = vperm.slane %v426, %v465
      %vm467 = vcmask 195712
      %v468 = vsel %vm467, %v466, %v464
      %v469 = vadd.s32 %v459, 4294967272
      %v470 = vperm.slane %v429, %v469
      %vm471 = vcmask 261312
      %v472 = vsel %vm471, %v470, %v468
      %v473 = vadd.s32 %v459, 4294967264
      %v474 = vperm.slane %v432, %v473
      %vm475 = vcmask 326912
      %v476 = vsel %vm475, %v474, %v472
      %v477 = vperm.slane %v435, %v459
      %v478 = vperm.slane %v438, %v461
      %v479 = vsel %vm463, %v478, %v477
      %v480 = vperm.slane %v441, %v465
      %v481 = vsel %vm467, %v480, %v479
      %v482 = vperm.slane %v444, %v469
      %v483 = vsel %vm471, %v482, %v481
      %v484 = vperm.slane %v447, %v473
      %v485 = vsel %vm475, %v484, %v483
      %vm486 = vcmask 1041409
      %v487 = vsel %vm486, %v485, %v476
      %vm489 = vcmask 320512
      %v490 = vsel %vm489, %v487, 0.0
      %491 = vadd.xlane.f32.xlu0 %v490
      %v492 = vpop.xlane.xlu0 %491
      %v493 = vld [vmem:[%s4] sm:$0x3]
      %v494 = vadd.f32 %v492, %v493
      %vm495 = vcmask 1024
      %496 = vst.msk [vmem:[%s219] sm:$0x3] %vm495, %v494
      %p497 = scmp.lt.s32.totalorder %s16, 1
      %s498 = scalar_select %p497, %s16, 1
      %s499 = smul.addr %s498, 2
      %s500 = scalar_lea.vmem %s5, %s499
      // Predicated region
      $region41: #{shallow_convnet_forward.1} parent=39 // pred_check
        %p501 = pneg %p144
      $region42: #{shallow_convnet_forward.1} parent=39 // pred_check_branch
        %503 = sbr.rel (%p501) target = $region44
      $region43: #{shallow_convnet_forward.1} parent=39 // pred_region
        _
      $region44: #{shallow_convnet_forward.1} parent=39 // pred_fallthru
        _
    $region40: #{shallow_convnet_forward.1} parent=5 // pred_fallthru
      _
    %p504 = scmp.le.s32.totalorder 2, %s11
    // Predicated region
    $region45: #{shallow_convnet_forward.1} parent=5 // pred_check
      %p505 = pneg %p504
    $region46: #{shallow_convnet_forward.1} parent=5 // pred_check_branch
      %507 = sbr.rel (%p505) target = $region48
    $region47: #{shallow_convnet_forward.1} parent=5 // pred_region
      %s508 = ssub.s32 %s11, 2
      // Predicated region
      $region49: #{shallow_convnet_forward.1} parent=47 // pred_check
        %p509 = pneg %p150
      $region50: #{shallow_convnet_forward.1} parent=47 // pred_check_branch
        %511 = sbr.rel (%p509) target = $region52
      $region51: #{shallow_convnet_forward.1} parent=47 // pred_region
        %p512 = scmp.lt.s32.totalorder %s17, 1
        %s513 = scalar_select %p512, %s17, 1
        %s514 = smul.addr %s513, 2
        %s515 = scalar_lea.vmem %s5, %s514
      $region52: #{shallow_convnet_forward.1} parent=47 // pred_fallthru
        _
    $region48: #{shallow_convnet_forward.1} parent=5 // pred_fallthru
      _
  $region6: #{shallow_convnet_forward.1} parent=0 // loop_footer
    %s15 = sadd.s32 1, %s11
  $region7: #{shallow_convnet_forward.1} parent=0 // loop_footer_branch
    %10 = sbr.rel target = $region3
  $region8: #{shallow_convnet_forward.1} parent=0 // loop_exit
    _

</llo_original>
